<compile_context>
chip_gen: v7x
topology: tpu7x:2x2x1
jax: 0.10.0
libtpu: 0.0.40
codegen_flags: <defaults>
</compile_context>

<pallas_src>
import functools

import jax
import jax.numpy as jnp
from jax.experimental import pallas as pl
from jax.experimental.pallas import tpu as pltpu


# ---------------------------------------------------------------------------
# Fused kernel: sigmoid -> 3x3 conv (one K=9C+1 matmul) -> ReLU -> GAP -> FC
# ---------------------------------------------------------------------------
def _cam_fused_kernel(x_ref, m_ref, c_ref, o_ref, *, C, H, W, F, NC, FC_COL):
    """
    x_ref : (C, H*W)     raw image parameter, row-major flattened
    m_ref : (K, H*W)     zero-pad boundary mask per tap (row k*C+c = tap k),
                         last row = all ones (drives the folded conv bias)
    c_ref : (F+1, CW)    packed constants:
                           [0:F, 0:K]                conv weight (tap-major) | bias
                           [0:F, FC_COL:FC_COL+NC]   fc weight * 1/(H*W)
                           [F,   FC_COL:FC_COL+NC]   fc bias
    o_ref : (1, NC)      logits
    """
    L = H * W
    K = 9 * C + 1

    # --- sigmoid in a single whole-tile EUP pass (no VALU divide) ----------
    sig = 0.5 * (jnp.tanh(0.5 * x_ref[...]) + 1.0)                 # (C, L)

    # --- nine shifted taps via lane rotation (XLU) + ones row for the bias --
    parts = []
    for kh in range(3):
        for kw in range(3):
            d = (kh - 1) * W + (kw - 1)          # flat offset of this tap
            parts.append(pltpu.roll(sig, (-d) % L, axis=1) if d else sig)
    parts.append(m_ref[K - 1:K, :])              # constant-ones row -> conv bias
    taps = jnp.concatenate(parts, axis=0) * m_ref[...]             # (K, L)

    # --- one fused MXU matmul (conv + bias), then ReLU -----------------------
    w_all = c_ref[0:F, 0:K]                                        # (F, K)
    act = jnp.maximum(
        jnp.dot(w_all, taps, preferred_element_type=jnp.float32), 0.0)  # (F, L)

    # --- global average pool (1/(H*W) folded into fc weight) + linear head --
    gap = jnp.sum(act, axis=1, keepdims=True)                      # (F, 1)
    wf = c_ref[0:F, FC_COL:FC_COL + NC]                            # (F, NC)
    bf = c_ref[F:F + 1, FC_COL:FC_COL + NC]                        # (1, NC)
    o_ref[...] = jnp.sum(gap * wf, axis=0, keepdims=True) + bf     # (1, NC)


# ---------------------------------------------------------------------------
# Wrapper: one-time layout prep + single pallas_call (3 inputs, 1 output)
# ---------------------------------------------------------------------------
def make_cam_apply(input_size, conv_w, conv_b, fc_w, fc_b):
    C, H, W = input_size
    F = conv_w.shape[0]
    NC = fc_w.shape[1]
    L = H * W
    K = 9 * C + 1
    FC_COL = max(48, K)            # lane offset of the fc block in consts
    CW = FC_COL + NC               # consts lane width

    # ---- packed constants buffer (built once, closure constant under jit) --
    # conv weight tap-major: col k*C + c = W[f, c, kh, kw], k = kh*3 + kw
    wfused = jnp.transpose(conv_w, (0, 2, 3, 1)).reshape(F, 9 * C)
    consts = jnp.zeros((F + 1, CW), jnp.float32)
    consts = consts.at[0:F, 0:9 * C].set(wfused.astype(jnp.float32))
    consts = consts.at[0:F, 9 * C].set(conv_b.astype(jnp.float32))
    consts = consts.at[0:F, FC_COL:FC_COL + NC].set(
        fc_w.astype(jnp.float32) / float(H * W))          # fold 1/(H*W) into fc
    consts = consts.at[F, FC_COL:FC_COL + NC].set(fc_b.astype(jnp.float32))

    # ---- per-tap zero-padding boundary masks (repeated per channel) --------
    hh = jnp.arange(L) // W
    ww = jnp.arange(L) % W
    rows = []
    for kh in range(3):
        for kw in range(3):
            ih = hh + (kh - 1)
            iw = ww + (kw - 1)
            valid = ((ih >= 0) & (ih < H) & (iw >= 0) & (iw < W)
                     ).astype(jnp.float32)
            rows.extend([valid] * C)
    rows.append(jnp.ones((L,), jnp.float32))               # ones row (bias tap)
    masks = jnp.stack(rows, axis=0)                        # (K, L)

    kernel = functools.partial(_cam_fused_kernel, C=C, H=H, W=W, F=F, NC=NC,
                               FC_COL=FC_COL)
    vmem = pl.BlockSpec(memory_space=pltpu.MemorySpace.VMEM)

    flops = int(2 * F * K * L + F * L + K * L + 2 * F * NC)
    bytes_accessed = int(4 * (C * L + K * L + (F + 1) * CW + NC))

    call = pl.pallas_call(
        kernel,
        out_shape=jax.ShapeDtypeStruct((1, NC), jnp.float32),
        in_specs=[vmem, vmem, vmem],
        out_specs=vmem,
        cost_estimate=pl.CostEstimate(flops=flops,
                                      transcendentals=int(C * L),
                                      bytes_accessed=bytes_accessed),
    )

    @jax.jit
    def apply(input_image):
        # contiguous reshape of the parameter (free); everything else in-kernel
        x_flat = input_image.astype(jnp.float32).reshape(C, L)
        return call(x_flat, masks, consts)

    return apply


def make_cam_wrapper(input_size, conv_w, conv_b, fc_w, fc_b):
    # torch.zeros(input_size) Parameter (requires_grad=True in the original)
    input_image = jnp.zeros(input_size, dtype=jnp.float32)
    apply = make_cam_apply(input_size, conv_w, conv_b, fc_w, fc_b)

    def forward(_, state=None):
        # transform is identity (default); .unsqueeze(0) -> batch of 1 is
        # realized as the (1, NC) logits.  `_` and `state` are ignored, as in
        # the PyTorch module's own compute path.
        return apply(input_image)

    return forward, input_image, apply


# ---------------------------------------------------------------------------
# Reference (pure JAX) for sanity checking
# ---------------------------------------------------------------------------
def reference_forward(input_image, conv_w, conv_b, fc_w, fc_b):
    img = jax.nn.sigmoid(input_image)[None]                      # (1, C, H, W)
    conv = jax.lax.conv_general_dilated(
        img, conv_w, window_strides=(1, 1), padding=((1, 1), (1, 1)),
        dimension_numbers=("NCHW", "OIHW", "NCHW"))              # (1, F, H, W)
    conv = conv + conv_b[None, :, None, None]
    act = jnp.maximum(conv, 0.0)
    gap = jnp.mean(act, axis=(2, 3))                             # (1, F)
    return gap @ fc_w + fc_b[None]                               # (1, NC)


if __name__ == "__main__":
    C, H, W = 4, 16, 16
    F_OUT, NUM_CLASSES = 8, 10

    key = jax.random.PRNGKey(0)
    k1, k2, k3, k4, k5 = jax.random.split(key, 5)
    conv_w = 0.1 * jax.random.normal(k1, (F_OUT, C, 3, 3), dtype=jnp.float32)
    conv_b = 0.1 * jax.random.normal(k2, (F_OUT,), dtype=jnp.float32)
    fc_w = 0.1 * jax.random.normal(k3, (F_OUT, NUM_CLASSES), dtype=jnp.float32)
    fc_b = 0.1 * jax.random.normal(k4, (NUM_CLASSES,), dtype=jnp.float32)

    forward, input_image, apply = make_cam_wrapper((C, H, W),
                                                   conv_w, conv_b, fc_w, fc_b)

    # forward(_, state): both args ignored by the wrapper's own compute.
    dummy_x = jax.random.normal(jax.random.PRNGKey(1), (2, C, H, W), jnp.float32)
    out = jax.block_until_ready(forward(dummy_x, state={}))
    assert out.shape == (1, NUM_CLASSES)
    ref = reference_forward(input_image, conv_w, conv_b, fc_w, fc_b)
    assert jnp.allclose(out, ref, atol=1e-4, rtol=1e-4)

    # Stronger check with a non-trivial image (catches tap-shift / mask /
    # channel-ordering bugs that the constant zero init image would hide).
    rand_img = jax.random.normal(k5, (C, H, W), jnp.float32)
    out2 = jax.block_until_ready(apply(rand_img))
    ref2 = reference_forward(rand_img, conv_w, conv_b, fc_w, fc_b)
    assert jnp.allclose(out2, ref2, atol=1e-4, rtol=1e-4)

    print("KERNEL_OK")
</pallas_src>

<mosaic_0001>
module attributes {stable_mosaic.version = 11 : i64} {
  func.func @_cam_fused_kernel(%arg0: memref<4x256xf32, #tpu.memory_space<vmem>>, %arg1: memref<37x256xf32, #tpu.memory_space<vmem>>, %arg2: memref<9x58xf32, #tpu.memory_space<vmem>>, %arg3: memref<1x10xf32, #tpu.memory_space<vmem>>) attributes {dimension_semantics = [], scalar_prefetch = 0 : i64, scratch_operands = 0 : i64, tpu.core_type = #tpu.core_type<tc>} {
    %c0 = arith.constant 0 : index
    %c0_0 = arith.constant 0 : index
    %0 = vector.load %arg0[%c0, %c0_0] : memref<4x256xf32, #tpu.memory_space<vmem>>, vector<4x256xf32>
    %cst = arith.constant 5.000000e-01 : f32
    %1 = vector.broadcast %cst : f32 to vector<4x256xf32>
    %2 = arith.mulf %1, %0 : vector<4x256xf32>
    %3 = math.tanh %2 : vector<4x256xf32>
    %cst_1 = arith.constant 1.000000e+00 : f32
    %4 = vector.broadcast %cst_1 : f32 to vector<4x256xf32>
    %5 = arith.addf %3, %4 : vector<4x256xf32>
    %cst_2 = arith.constant 5.000000e-01 : f32
    %6 = vector.broadcast %cst_2 : f32 to vector<4x256xf32>
    %7 = arith.mulf %6, %5 : vector<4x256xf32>
    %c17_i32 = arith.constant 17 : i32
    %8 = tpu.dynamic_rotate %7 by %c17_i32 dim 1 : vector<4x256xf32>, i32 -> vector<4x256xf32>
    %c16_i32 = arith.constant 16 : i32
    %9 = tpu.dynamic_rotate %7 by %c16_i32 dim 1 : vector<4x256xf32>, i32 -> vector<4x256xf32>
    %c15_i32 = arith.constant 15 : i32
    %10 = tpu.dynamic_rotate %7 by %c15_i32 dim 1 : vector<4x256xf32>, i32 -> vector<4x256xf32>
    %c1_i32 = arith.constant 1 : i32
    %11 = tpu.dynamic_rotate %7 by %c1_i32 dim 1 : vector<4x256xf32>, i32 -> vector<4x256xf32>
    %c255_i32 = arith.constant 255 : i32
    %12 = tpu.dynamic_rotate %7 by %c255_i32 dim 1 : vector<4x256xf32>, i32 -> vector<4x256xf32>
    %c241_i32 = arith.constant 241 : i32
    %13 = tpu.dynamic_rotate %7 by %c241_i32 dim 1 : vector<4x256xf32>, i32 -> vector<4x256xf32>
    %c240_i32 = arith.constant 240 : i32
    %14 = tpu.dynamic_rotate %7 by %c240_i32 dim 1 : vector<4x256xf32>, i32 -> vector<4x256xf32>
    %c239_i32 = arith.constant 239 : i32
    %15 = tpu.dynamic_rotate %7 by %c239_i32 dim 1 : vector<4x256xf32>, i32 -> vector<4x256xf32>
    %c36 = arith.constant 36 : index
    %c0_3 = arith.constant 0 : index
    %16 = vector.load %arg1[%c36, %c0_3] : memref<37x256xf32, #tpu.memory_space<vmem>>, vector<1x256xf32>
    %17 = tpu.concatenate %8, %9, %10, %11, %7, %12, %13, %14, %15, %16 in 0 : vector<4x256xf32>, vector<4x256xf32>, vector<4x256xf32>, vector<4x256xf32>, vector<4x256xf32>, vector<4x256xf32>, vector<4x256xf32>, vector<4x256xf32>, vector<4x256xf32>, vector<1x256xf32> -> vector<37x256xf32>
    %c0_4 = arith.constant 0 : index
    %c0_5 = arith.constant 0 : index
    %18 = vector.load %arg1[%c0_4, %c0_5] : memref<37x256xf32, #tpu.memory_space<vmem>>, vector<37x256xf32>
    %19 = arith.mulf %17, %18 : vector<37x256xf32>
    %c0_6 = arith.constant 0 : index
    %c0_7 = arith.constant 0 : index
    %20 = vector.load %arg2[%c0_6, %c0_7] : memref<9x58xf32, #tpu.memory_space<vmem>>, vector<8x37xf32>
    %cst_8 = arith.constant dense<0.000000e+00> : vector<8x256xf32>
    %21 = tpu.matmul %20, %19, %cst_8 {dimension_numbers = #tpu.dot_dimension_numbers<[1], [0], [0], [1], [0, 0, 1, 1], [], []>} : vector<8x37xf32>, vector<37x256xf32>, vector<8x256xf32> -> vector<8x256xf32>
    %cst_9 = arith.constant 0.000000e+00 : f32
    %22 = vector.broadcast %cst_9 : f32 to vector<8x256xf32>
    %23 = arith.maximumf %21, %22 : vector<8x256xf32>
    %cst_10 = arith.constant dense<0.000000e+00> : vector<8xf32>
    %24 = vector.multi_reduction <add>, %23, %cst_10 [1] : vector<8x256xf32> to vector<8xf32>
    %25 = vector.shape_cast %24 : vector<8xf32> to vector<8x1xf32>
    %c0_11 = arith.constant 0 : index
    %c48 = arith.constant 48 : index
    %26 = vector.load %arg2[%c0_11, %c48] : memref<9x58xf32, #tpu.memory_space<vmem>>, vector<8x10xf32>
    %c8 = arith.constant 8 : index
    %c48_12 = arith.constant 48 : index
    %27 = vector.load %arg2[%c8, %c48_12] : memref<9x58xf32, #tpu.memory_space<vmem>>, vector<1x10xf32>
    %28 = vector.broadcast %25 : vector<8x1xf32> to vector<8x10xf32>
    %29 = arith.mulf %28, %26 : vector<8x10xf32>
    %cst_13 = arith.constant dense<0.000000e+00> : vector<10xf32>
    %30 = vector.multi_reduction <add>, %29, %cst_13 [0] : vector<8x10xf32> to vector<10xf32>
    %31 = vector.shape_cast %30 : vector<10xf32> to vector<1x10xf32>
    %32 = arith.addf %31, %27 : vector<1x10xf32>
    %c0_14 = arith.constant 0 : index
    %c0_15 = arith.constant 0 : index
    %33 = vector.load %arg3[%c0_14, %c0_15] : memref<1x10xf32, #tpu.memory_space<vmem>>, vector<1x10xf32>
    tpu.vector_store %arg3[%c0_14, %c0_15], %32 {strides = array<i32>} : memref<1x10xf32, #tpu.memory_space<vmem>>, vector<1x10xf32>,
    return
  }
}

</mosaic_0001>

<llo_original>
// kernel: apply.1
$region0: #{apply.1}
  #allocation0 [shape = 'u32[]', space=smem, size = 0x4, offset = 0x4, fixed_abs, tag = 'smem constant byte address 0x4 - core index']
  #allocation1 [shape = 'u32[144,128]{1,0:T(1,128)}', space=vmem, size = 0x12000, scoped, tag = 'internal scratch']
  %s0 = inlined_call_operand.vmem [shape: f32[4,256], index: 0, kind: input, shape index: {}]
  %s1 = inlined_call_operand.hbm [shape: f32[37,256], index: 1, kind: input, shape index: {}]
  %s2 = inlined_call_operand.vmem [shape: f32[9,58], index: 2, kind: input, shape index: {}]
  %s3 = inlined_call_operand.hbm [shape: f32[1,10], index: 3, kind: output, shape index: {}]
  %s4 = sld [smem:[#allocation0]]
  $region26: #{apply.1} parent=0
    _
  %s6 = ssub.s32 1, %s4
  %s7 = scalar_select 0, %s6, %s4
  $region1: #{apply.1} parent=0
    #allocation2 [shape = 'u8[40960]{0}', space=vmem, size = 0xa000, scoped, tag = 'input window, operand 1, single buffered']
    #allocation3 [shape = 's32[1]{0}', space=sflag, size = 0x4, scoped, tag = 'scoped memory for apply.1']
    #allocation4 [shape = 's32[1]{0}', space=sflag, size = 0x4, scoped, tag = 'scoped memory for apply.1']
    #allocation5 [shape = 'u8[512]{0}', space=vmem, size = 0x400, scoped, tag = 'output window, operand 0, single buffered']
    %8 = vsyncpa [#allocation3], 0
    %9 = vsyncpa [#allocation4], 0
    // Predicated region
    $region2: #{apply.1} parent=1 // pred_check
      _
    $region3: #{apply.1} parent=1 // pred_check_branch
      %11 = sbr.rel (0) target = $region5
    $region4: #{apply.1} parent=1 // pred_region
      _
    $region5: #{apply.1} parent=1 // pred_fallthru
      _
    // Predicated region
    $region6: #{apply.1} parent=1 // pred_check
      _
    $region7: #{apply.1} parent=1 // pred_check_branch
      %13 = sbr.rel (0) target = $region9
    $region8: #{apply.1} parent=1 // pred_region
      %s15 = ssub.s32 1280, 1280
      %16 = vsyncadd [#allocation3], %s15
      %s17 = sshll.u32 [#allocation2], 4
      %s18 = int_to_ptr.vmem [resolvable:$true] %s17
      %23 = dma.hbm_to_vmem [thread:$0]  %s1, 1280, %s18, [#allocation3], 256, 256, 16
    $region9: #{apply.1} parent=1 // pred_fallthru
      _
    // Predicated region
    $region10: #{apply.1} parent=1 // pred_check
      _
    $region11: #{apply.1} parent=1 // pred_check_branch
      %25 = sbr.rel (0) target = $region13
    $region12: #{apply.1} parent=1 // pred_region
      _
    $region13: #{apply.1} parent=1 // pred_fallthru
      _
    // Predicated region
    $region14: #{apply.1} parent=1 // pred_check
      _
    $region15: #{apply.1} parent=1 // pred_check_branch
      %27 = sbr.rel (0) target = $region17
    $region16: #{apply.1} parent=1 // pred_region
      %28 = dma.done [#allocation3], 1280
    $region17: #{apply.1} parent=1 // pred_fallthru
      _
    %v29 = vld [vmem:[%s0] sm:$0xff]
    %v30 = vmul.f32 %v29, 0.5
    %v31 = vtanh.pop %v30
    %v32 = vadd.f32 %v31, 1.0
    %v33 = vmul.f32 %v32, 0.5
    %v35 = vcombine.high %v33, %v33
    %37 = vrot.lane.b32.xlu0 %v33, 17
    %v38 = vpop.permute.xlu0 %37
    %39 = vrot.lane.b32.xlu0 %v35, 17
    %v40 = vpop.permute.xlu0 %39
    %v41 = vlaneseq
    %v42 = vand.u32 %v41, 127
    %vm43 = vcmp.lt.s32.totalorder %v42, 17
    %v44 = vsel %vm43, %v38, %v40
    %v45 = vsel %vm43, %v40, %v38
    %46 = vrot.lane.b32.xlu0 %v33, 16
    %v47 = vpop.permute.xlu0 %46
    %48 = vrot.lane.b32.xlu0 %v35, 16
    %v49 = vpop.permute.xlu0 %48
    %vm50 = vcmp.lt.s32.totalorder %v42, 16
    %v51 = vsel %vm50, %v47, %v49
    %v52 = vsel %vm50, %v49, %v47
    %53 = vrot.lane.b32.xlu0 %v33, 15
    %v54 = vpop.permute.xlu0 %53
    %55 = vrot.lane.b32.xlu0 %v35, 15
    %v56 = vpop.permute.xlu0 %55
    %vm57 = vcmp.lt.s32.totalorder %v42, 15
    %v58 = vsel %vm57, %v54, %v56
    %v59 = vsel %vm57, %v56, %v54
    %60 = vrot.lane.b32.xlu0 %v33, 1
    %v61 = vpop.permute.xlu0 %60
    %62 = vrot.lane.b32.xlu0 %v35, 1
    %v63 = vpop.permute.xlu0 %62
    %vm64 = vcmp.lt.s32.totalorder %v42, 1
    %v65 = vsel %vm64, %v61, %v63
    %v66 = vsel %vm64, %v63, %v61
    %67 = vrot.lane.b32.xlu0 %v33, 127
    %v68 = vpop.permute.xlu0 %67
    %69 = vrot.lane.b32.xlu0 %v35, 127
    %v70 = vpop.permute.xlu0 %69
    %vm71 = vcmp.lt.s32.totalorder %v42, 127
    %v72 = vsel %vm71, %v68, %v70
    %v73 = vsel %vm71, %v70, %v68
    %74 = vrot.lane.b32.xlu0 %v33, 113
    %v75 = vpop.permute.xlu0 %74
    %76 = vrot.lane.b32.xlu0 %v35, 113
    %v77 = vpop.permute.xlu0 %76
    %vm78 = vcmp.lt.s32.totalorder %v42, 113
    %v79 = vsel %vm78, %v75, %v77
    %v80 = vsel %vm78, %v77, %v75
    %81 = vrot.lane.b32.xlu0 %v33, 112
    %v82 = vpop.permute.xlu0 %81
    %83 = vrot.lane.b32.xlu0 %v35, 112
    %v84 = vpop.permute.xlu0 %83
    %vm85 = vcmp.lt.s32.totalorder %v42, 112
    %v86 = vsel %vm85, %v82, %v84
    %v87 = vsel %vm85, %v84, %v82
    %88 = vrot.lane.b32.xlu0 %v33, 111
    %v89 = vpop.permute.xlu0 %88
    %90 = vrot.lane.b32.xlu0 %v35, 111
    %v91 = vpop.permute.xlu0 %90
    %vm92 = vcmp.lt.s32.totalorder %v42, 111
    %v93 = vsel %vm92, %v89, %v91
    %v94 = vsel %vm92, %v91, %v89
    %s95 = scalar_lea.vmem [#allocation2], 68
    %v96 = vld [vmem:[%s95] ss:$8 sm:$0x3]
    %v99 = vrot.slane %v52, 4
    %v100 = vrot.slane %v51, 4
    %v105 = vrot.slane %v66, 4
    %v106 = vrot.slane %v65, 4
    %v111 = vrot.slane %v72, 4
    %v112 = vrot.slane %v73, 4
    %v117 = vrot.slane %v86, 4
    %v118 = vrot.slane %v87, 4
    %v122 = vlaneseq
    %v123 = vshrl.u32 %v122, 7
    %v124 = vsub.s32 0, %v123
    %v125 = vrot.slane %v96, %v124
    %v126 = vlaneseq
    %v127 = vshrl.u32 %v126, 7
    %v128 = vsub.s32 1, %v127
    %v129 = vrot.slane %v96, %v128
    %vm132 = vcmask 1043456
    %v133 = vsel %vm132, %v45, %v99
    %v134 = vsel %vm132, %v44, %v100
    %v135 = vsel %vm132, %v59, %v105
    %v136 = vsel %vm132, %v58, %v106
    %v137 = vsel %vm132, %v33, %v111
    %v138 = vsel %vm132, %v35, %v112
    %v139 = vsel %vm132, %v79, %v117
    %v140 = vsel %vm132, %v80, %v118
    %v141 = vsel %vm132, %v93, %v125
    %v142 = vsel %vm132, %v94, %v129
    %v143 = vld [vmem:[#allocation2] sm:$0xff]
    %v144 = vld [vmem:[#allocation2 + $0x8] sm:$0xff]
    %v145 = vld [vmem:[#allocation2 + $0x10] sm:$0xff]
    %v146 = vld [vmem:[#allocation2 + $0x18] sm:$0xff]
    %v147 = vld [vmem:[#allocation2 + $0x20] sm:$0xff]
    %v148 = vld [vmem:[#allocation2 + $0x28] sm:$0xff]
    %v149 = vld [vmem:[#allocation2 + $0x30] sm:$0xff]
    %v150 = vld [vmem:[#allocation2 + $0x38] sm:$0xff]
    %v151 = vld [vmem:[#allocation2 + $0x40] sm:$0x1f]
    %v152 = vld [vmem:[#allocation2 + $0x48] sm:$0x1f]
    %v153 = vmul.f32 %v133, %v143
    %v154 = vmul.f32 %v134, %v144
    %v155 = vmul.f32 %v135, %v145
    %v156 = vmul.f32 %v136, %v146
    %v157 = vmul.f32 %v137, %v147
    %v158 = vmul.f32 %v138, %v148
    %v159 = vmul.f32 %v139, %v149
    %v160 = vmul.f32 %v140, %v150
    %v161 = vmul.f32 %v141, %v151
    %v162 = vmul.f32 %v142, %v152
    %v163 = vld [vmem:[%s2] sm:$0xff]
    %vm164 = vcmask 302080
    %v166 = vsel %vm164, %v163, 0
    %vm168 = vcmask 1044480
    %v170 = vsel %vm168, %v161, 0
    %v173 = vsel %vm168, %v162, 0
    %175 = vmatprep.subr.mxu0 %v154
    %176 = vmatpush1.msra.mxu0 %v153
    %177 = vmatprep.subr.mxu0 %v156
    %178 = vmatpush1.msra.mxu0 %v155
    %179 = vmatprep.subr.mxu0 %v158
    %180 = vmatpush1.msra.mxu0 %v157
    %181 = vmatprep.subr.mxu0 %v160
    %182 = vmatpush1.msra.mxu0 %v159
    %183 = vmatprep.subr.mxu0 %v173
    %184 = vmatpush1.msra.mxu0 %v170
    %185 = vmatprep.subr.mxu0 0.0
    %186 = vmatpush1.msra.mxu0 0.0
    %187 = vmatprep.subr.mxu0 0.0
    %188 = vmatpush1.msra.mxu0 0.0
    %189 = vmatprep.subr.mxu0 0.0
    %190 = vmatpush1.msra.mxu0 0.0
    %191 = vmatprep.subr.mxu0 0.0
    %192 = vmatpush1.msra.mxu0 0.0
    %193 = vmatprep.subr.mxu0 0.0
    %194 = vmatpush1.msra.mxu0 0.0
    %195 = vmatprep.subr.mxu0 0.0
    %196 = vmatpush1.msra.mxu0 0.0
    %197 = vmatprep.subr.mxu0 0.0
    %198 = vmatpush1.msra.mxu0 0.0
    %199 = vmatprep.subr.mxu0 0.0
    %200 = vmatpush1.msra.mxu0 0.0
    %201 = vmatprep.subr.mxu0 0.0
    %202 = vmatpush1.msra.mxu0 0.0
    %203 = vmatprep.subr.mxu0 0.0
    %204 = vmatpush1.msra.mxu0 0.0
    %205 = vmatprep.subr.mxu0 0.0
    %206 = vmatpush1.msra.mxu0 0.0
    %207 = vmatprep.subr.mxu0 0.0
    %208 = vmatpush1.msra.mxu0 0.0
    %209 = vmatprep.subr.mxu0 0.0
    %210 = vmatpush1.msra.mxu0 0.0
    %211 = vmatprep.subr.mxu0 0.0
    %212 = vmatpush1.msra.mxu0 0.0
    %213 = vmatprep.subr.mxu0 0.0
    %214 = vmatpush1.msra.mxu0 0.0
    %215 = vmatprep.subr.mxu0 0.0
    %216 = vmatpush1.msra.mxu0 0.0
    %217 = vmatprep.subr.mxu0 0.0
    %218 = vmatpush1.msra.mxu0 0.0
    %219 = vmatprep.subr.mxu0 0.0
    %220 = vmatpush1.msra.mxu0 0.0
    %221 = vmatprep.subr.mxu0 0.0
    %222 = vmatpush1.msra.mxu0 0.0
    %223 = vmatprep.subr.mxu0 0.0
    %224 = vmatpush1.msra.mxu0 0.0
    %225 = vmatprep.subr.mxu0 0.0
    %226 = vmatpush1.msra.mxu0 0.0
    %227 = vmatprep.subr.mxu0 0.0
    %228 = vmatpush1.msra.mxu0 0.0
    %229 = vmatprep.subr.mxu0 0.0
    %230 = vmatpush1.msra.mxu0 0.0
    %231 = vmatprep.subr.mxu0 0.0
    %232 = vmatpush1.msra.mxu0 0.0
    %233 = vmatprep.subr.mxu0 0.0
    %234 = vmatpush1.msra.mxu0 0.0
    %235 = vmatprep.subr.mxu0 0.0
    %236 = vmatpush1.msra.mxu0 0.0
    %237 = vmatprep.subr.mxu0 0.0
    %238 = vmatpush1.msra.mxu0 0.0
    %239 = vmatprep.mubr.f32.mxu0 0.0
    %240 = vmatmul.mubr.f32.gmra.mrb[0].mxu0 %v166
    %v241 = vpop.f32.mrb[0].mxu0
    %v242 = vadd.f32 0.0, %v241
    %v243 = vpop.f32.mrb[0].mxu0
    %v244 = vadd.f32 0.0, %v243
    %245 = vdwg.mxu0
    %v246 = vmax.f32 %v242, 0.0
    %v247 = vmax.f32 %v244, 0.0
    %v248 = vadd.f32 %v246, %v247
    %249 = vadd.xlane.f32.xlu0 %v248
    %v250 = vpop.xlane.xlu0 %249
    %v251 = vld [vmem:[%s2 + $0x8] sm:$0x1]
    %v252 = vmul.f32 %v250, %v163
    %vm253 = vcmask 474496
    %v254 = vsel %vm253, %v252, 0.0
    %v255 = vrot.slane %v254, 4
    %v256 = vadd.f32 %v254, %v255
    %v257 = vrot.slane %v256, 2
    %v258 = vadd.f32 %v256, %v257
    %v259 = vrot.slane %v258, 1
    %v260 = vadd.f32 %v258, %v259
    %v261 = vadd.f32 %v260, %v251
    %263 = vrot.lane.b32.xlu0 %v261, 80
    %v264 = vpop.permute.xlu0 %263
    %vm266 = vcmask 73728
    %267 = vst.msk [vmem:[#allocation5] sm:$0x1] %vm266, %v264
    // Predicated region
    $region18: #{apply.1} parent=1 // pred_check
      _
    $region19: #{apply.1} parent=1 // pred_check_branch
      %269 = sbr.rel (0) target = $region21
    $region20: #{apply.1} parent=1 // pred_region
      %s271 = ssub.s32 16, 16
      %272 = vsyncadd [#allocation4], %s271
      %s274 = sshll.u32 [#allocation5], 4
      %s275 = int_to_ptr.vmem [resolvable:$true] %s274
      %277 = dma.vmem_to_hbm [thread:$0]  %s275, 16, %s3, [#allocation4]
    $region21: #{apply.1} parent=1 // pred_fallthru
      _
    // Predicated region
    $region22: #{apply.1} parent=1 // pred_check
      _
    $region23: #{apply.1} parent=1 // pred_check_branch
      %279 = sbr.rel (0) target = $region25
    $region24: #{apply.1} parent=1 // pred_region
      %280 = dma.done [#allocation4], 16
    $region25: #{apply.1} parent=1 // pred_fallthru
      _
    %281 = vsyncpa [#allocation3], 1
    %282 = vsyncpa [#allocation4], 1

</llo_original>
